<compile_context>
chip_gen: v7x
topology: tpu7x:2x2x1
jax: 0.10.0
libtpu: 0.0.40
codegen_flags: <defaults>
</compile_context>

<pallas_src>
import functools

import jax
import jax.numpy as jnp
from jax.experimental import pallas as pl
from jax.experimental.pallas import tpu as pltpu


def _sinusoidal_kernel(t_ref, inv_denom_ref, out_ref):
    """t_ref: (TB, 1) f32; inv_denom_ref: (1, half_dim) f32; out_ref: (TB, emb_dim) f32."""
    _, emb_dim = out_ref.shape
    half_dim = emb_dim // 2

    # (TB, 1) * (1, half_dim) -> (TB, half_dim): lane-broadcast of t, sublane-
    # broadcast of the VMEM-resident inverse scale.  Multiply instead of divide.
    emb = t_ref[...] * inv_denom_ref[...]

    # Two half-width stores.  For emb_dim=256 (half_dim=128) both halves are
    # 128-lane aligned -> unmasked vst.  (For emb_dim < 256 the stores are
    # masked -- a perf-only concern on negligible data; if such configs ever
    # get hot, present a lane-dense (B/k, k*emb_dim) slab instead.)
    out_ref[:, :half_dim] = jnp.sin(emb)
    out_ref[:, half_dim:] = jnp.cos(emb)


@functools.partial(jax.jit, static_argnames=("emb_dim", "block_b"))
def sinusoidal_positional_embedding(timestep, emb_dim: int = 256, block_b: int = 4096):
    """Pallas TPU equivalent of SinusoidalPositionalEmbedding.forward.

    timestep: (B,) array (any real dtype).  Returns (B, emb_dim) f32 with
    [:, :emb_dim//2] = sin and [:, emb_dim//2:] = cos.
    """
    if emb_dim % 2 != 0:
        raise ValueError("Positional embedding dimension must be divisible by 2.")
    B = timestep.shape[0]
    half_dim = emb_dim // 2
    t2 = timestep.reshape(B, 1).astype(jnp.float32)

    # Precompute the inverse denominator once in the wrapper (XLA, outside the
    # grid loop).  Its BlockSpec index is constant -> DMA'd once, VMEM-resident.
    factor = 2.0 * jnp.arange(0, half_dim, dtype=jnp.float32) / jnp.float32(half_dim)
    inv_denom = (1.0 / jnp.power(jnp.float32(10000.0), factor)).reshape(1, half_dim)

    # Tile over B: double-buffered writeback for large batches.  At the default
    # block_b=4096, emb_dim=256: 2 * 4 MiB output buffers + ~O(MiB) elementwise
    # temporaries per core -- within the explicit 32 MiB scoped-VMEM limit on
    # every chip (and v7x's per-core VMEM with both TCs active).
    tb = min(block_b, B)
    grid = (pl.cdiv(B, tb),)

    # Truthful cost: sin/cos are VPU polynomial sequences (~20 flops each), not
    # EUP transcendentals; plus one multiply per element.
    cost = pl.CostEstimate(
        flops=21 * B * emb_dim,
        transcendentals=0,
        bytes_accessed=4 * (B + half_dim + B * emb_dim),
    )

    return pl.pallas_call(
        _sinusoidal_kernel,
        out_shape=jax.ShapeDtypeStruct((B, emb_dim), jnp.float32),
        grid=grid,
        in_specs=[
            pl.BlockSpec((tb, 1), lambda i: (i, 0)),
            pl.BlockSpec((1, half_dim), lambda i: (0, 0)),
        ],
        out_specs=pl.BlockSpec((tb, emb_dim), lambda i: (i, 0)),
        compiler_params=pltpu.CompilerParams(
            # Shards B-tiles across v7x's 2 TensorCores; near-no-op on v5e/v6e.
            dimension_semantics=("parallel",),
            # Cover the 4096-row tile on v5e's 16 MiB scoped default; still well
            # inside physical VMEM on all chips (128/128/64 MiB).
            vmem_limit_bytes=32 * 1024 * 1024,
        ),
        cost_estimate=cost,
    )(t2, inv_denom)


def _reference(timestep, emb_dim):
    """Direct JAX port of the PyTorch module (power + divide formulation)."""
    half_dim = emb_dim // 2
    factor = 2.0 * jnp.arange(0, half_dim, dtype=jnp.float32) / half_dim
    denominator = jnp.power(jnp.float32(10000.0), factor)
    embedding = timestep[:, None].astype(jnp.float32) / denominator
    return jnp.concatenate([jnp.sin(embedding), jnp.cos(embedding)], axis=-1)


if __name__ == "__main__":
    key = jax.random.PRNGKey(0)
    k1, k2 = jax.random.split(key)

    # Case 1: module default emb_dim=256, realistic diffusion timesteps in
    # [0, 1000).  block_b=16 -> grid of 3 tiles, exercising the pipelined path
    # and the constant-index (VMEM-resident) inv_denom input.
    B1, D1 = 48, 256
    t1 = jax.random.randint(k1, (B1,), 0, 1000).astype(jnp.float32)
    out1 = jax.block_until_ready(sinusoidal_positional_embedding(t1, D1, block_b=16))
    ref1 = _reference(t1, D1)
    assert out1.shape == (B1, D1)
    # Multiply-by-reciprocal differs from divide by O(|arg| * eps_f32) in the
    # sin/cos argument; at t < 1000 that is <~3e-4 absolute -- inherent f32
    # noise, not a semantic difference.
    assert float(jnp.max(jnp.abs(out1 - ref1))) < 2e-3, "mismatch vs reference (case 1)"

    # Case 2: small case with small timesteps -> tight agreement, single tile.
    B2, D2 = 8, 32
    t2 = jax.random.uniform(k2, (B2,), minval=0.0, maxval=4.0)
    out2 = jax.block_until_ready(sinusoidal_positional_embedding(t2, D2))
    ref2 = _reference(t2, D2)
    assert out2.shape == (B2, D2)
    assert jnp.allclose(out2, ref2, atol=2e-5, rtol=2e-5), "mismatch vs reference (case 2)"

    print("KERNEL_OK")
</pallas_src>

<mosaic_0001>
module attributes {stable_mosaic.version = 11 : i64} {
  func.func @_sinusoidal_kernel(%arg0: i32, %arg1: memref<16x1xf32, #tpu.memory_space<vmem>>, %arg2: memref<1x128xf32, #tpu.memory_space<vmem>>, %arg3: memref<16x256xf32, #tpu.memory_space<vmem>>) attributes {dimension_semantics = [#tpu.dimension_semantics<parallel>], iteration_bounds = array<i64: 3>, scalar_prefetch = 0 : i64, scratch_operands = 0 : i64, tpu.core_type = #tpu.core_type<tc>, window_params = [{transform_indices = @transform_0, window_bounds = array<i64: 16, 1>}, {pipeline_mode = #tpu.pipeline_mode<synchronous>, transform_indices = @transform_1, window_bounds = array<i64: 1, 128>}, {transform_indices = @transform_2, window_bounds = array<i64: 16, 256>}]} {
    %c0 = arith.constant 0 : index
    %c0_0 = arith.constant 0 : index
    %0 = vector.load %arg1[%c0, %c0_0] : memref<16x1xf32, #tpu.memory_space<vmem>>, vector<16x1xf32>
    %c0_1 = arith.constant 0 : index
    %c0_2 = arith.constant 0 : index
    %1 = vector.load %arg2[%c0_1, %c0_2] : memref<1x128xf32, #tpu.memory_space<vmem>>, vector<1x128xf32>
    %2 = vector.broadcast %0 : vector<16x1xf32> to vector<16x128xf32>
    %3 = vector.broadcast %1 : vector<1x128xf32> to vector<16x128xf32>
    %4 = arith.mulf %2, %3 : vector<16x128xf32>
    %5 = math.sin %4 : vector<16x128xf32>
    %c0_3 = arith.constant 0 : index
    %c0_4 = arith.constant 0 : index
    %6 = vector.load %arg3[%c0_3, %c0_4] : memref<16x256xf32, #tpu.memory_space<vmem>>, vector<16x128xf32>
    tpu.vector_store %arg3[%c0_3, %c0_4], %5 {strides = array<i32>} : memref<16x256xf32, #tpu.memory_space<vmem>>, vector<16x128xf32>,
    %7 = math.cos %4 : vector<16x128xf32>
    %c0_5 = arith.constant 0 : index
    %c128 = arith.constant 128 : index
    %8 = vector.load %arg3[%c0_5, %c128] : memref<16x256xf32, #tpu.memory_space<vmem>>, vector<16x128xf32>
    tpu.vector_store %arg3[%c0_5, %c128], %7 {strides = array<i32>} : memref<16x256xf32, #tpu.memory_space<vmem>>, vector<16x128xf32>,
    return
  }
  func.func @transform_0(%arg0: i32) -> (i32, i32) {
    %c0_i32 = arith.constant 0 : i32
    %c0_i32_0 = arith.constant 0 : i32
    return %arg0, %c0_i32 : i32, i32
  }
  func.func @transform_1(%arg0: i32) -> (i32, i32) {
    %c0_i32 = arith.constant 0 : i32
    %c0_i32_0 = arith.constant 0 : i32
    %c0_i32_1 = arith.constant 0 : i32
    return %c0_i32, %c0_i32_0 : i32, i32
  }
  func.func @transform_2(%arg0: i32) -> (i32, i32) {
    %c0_i32 = arith.constant 0 : i32
    %c0_i32_0 = arith.constant 0 : i32
    return %arg0, %c0_i32 : i32, i32
  }
}

</mosaic_0001>

<llo_original>
// kernel: sinusoidal_positional_embedding.1
$region0: #{sinusoidal_positional_embedding.1}
  #allocation0 [shape = 'u32[]', space=smem, size = 0x4, offset = 0x4, fixed_abs, tag = 'smem constant byte address 0x4 - core index']
  #allocation1 [shape = 'u32[144,128]{1,0:T(1,128)}', space=vmem, size = 0x12000, scoped, tag = 'internal scratch']
  %s0 = inlined_call_operand.vmem [shape: f32[48,1], index: 0, kind: input, shape index: {}]
  %s1 = inlined_call_operand.vmem [shape: f32[1,128], index: 1, kind: input, shape index: {}]
  %s2 = inlined_call_operand.hbm [shape: f32[48,256], index: 2, kind: output, shape index: {}]
  %s3 = sld [smem:[#allocation0]]
  $region41: #{sinusoidal_positional_embedding.1} parent=0
    _
  %s5 = ssub.s32 1, %s3
  %s6 = scalar_select 0, %s5, %s3
  $region1: #{sinusoidal_positional_embedding.1} parent=0
    #allocation2 [shape = 'u8[32768]{0}', space=vmem, size = 0x8000, scoped, tag = 'output window, operand 0']
    #allocation3 [shape = 's32[2]{0}', space=sflag, size = 0x8, scoped, tag = 'scoped memory for sinusoidal_positional_embedding.1']
    %7 = vsyncpa [#allocation3], 0
    %s8 = scalar_lea.sflag [#allocation3], 1
    %9 = vsyncpa %s8, 0
    loop: start=0, step=1, limit=5
    $region2: #{sinusoidal_positional_embedding.1} parent=1 // loop_pre_header
      _
    $region3: #{sinusoidal_positional_embedding.1} parent=1 // loop_header
      %s11 = sphi 0, %s15
      %p12 = scmp.ge.s32.totalorder %s11, 5
      %s21 = sphi 0, %s23
      %s24 = sphi 0, %s21
      %s25 = sphi 0, %s24
      %s41 = sphi 0, %s25
      %s45 = sphi 0, %s45
      %s47 = sphi 0, %s45
      %s48 = sphi 0, %s47
      %s62 = sphi 0, %s48
      %s68 = sphi 0, %s70
      %s71 = sphi 0, %s68
      %s72 = sphi 0, %s71
      %s88 = sphi 0, %s72
    $region4: #{sinusoidal_positional_embedding.1} parent=1 // loop_header_branch
      %14 = sbr.rel (%p12) target = $region8
    $region5: #{sinusoidal_positional_embedding.1} parent=1 // loop_body
      %s16 = ssub.s32 %s11, 1
      %s17 = ssub.s32 %s11, 2
      %s18 = sadd.s32 %s11, 1
      %s19 = ssub.s32 %s11, %s18
      %p20 = scmp.eq.s32.totalorder %s19, 0
      %s22 = sadd.s32 %s21, 1
      %s23 = scalar_select %p20, %s21, %s22
      %p26 = pneg %p20
      %p27 = scmp.eq.s32.totalorder %s11, 2
      %p28 = por %p26, %p27
      %p29 = scmp.ne.s32.totalorder %s21, %s24
      %p30 = scmp.eq.s32.totalorder %s11, 0
      %p31 = por %p29, %p30
      %p32 = scmp.ne.s32.totalorder %s21, %s24
      %p33 = scmp.eq.s32.totalorder %s16, 2
      %p34 = por %p32, %p33
      %p35 = scmp.ne.s32.totalorder %s24, %s25
      %p36 = scmp.eq.s32.totalorder %s16, 0
      %p37 = por %p35, %p36
      %p38 = scmp.ne.s32.totalorder %s24, %s25
      %p39 = scmp.eq.s32.totalorder %s17, 2
      %p40 = por %p38, %p39
      %p42 = scmp.ne.s32.totalorder %s25, %s41
      %p43 = scmp.eq.s32.totalorder %s17, 0
      %p44 = por %p42, %p43
      %s46 = sadd.s32 %s45, 1
      %p49 = scmp.eq.s32.totalorder %s11, 2
      %p50 = scmp.ne.s32.totalorder %s45, %s47
      %p51 = scmp.eq.s32.totalorder %s11, 0
      %p52 = por %p50, %p51
      %p53 = scmp.ne.s32.totalorder %s45, %s47
      %p54 = scmp.eq.s32.totalorder %s16, 2
      %p55 = por %p53, %p54
      %p56 = scmp.ne.s32.totalorder %s47, %s48
      %p57 = scmp.eq.s32.totalorder %s16, 0
      %p58 = por %p56, %p57
      %p59 = scmp.ne.s32.totalorder %s47, %s48
      %p60 = scmp.eq.s32.totalorder %s17, 2
      %p61 = por %p59, %p60
      %p63 = scmp.ne.s32.totalorder %s48, %s62
      %p64 = scmp.eq.s32.totalorder %s17, 0
      %p65 = por %p63, %p64
      %s66 = ssub.s32 %s11, %s18
      %p67 = scmp.eq.s32.totalorder %s66, 0
      %s69 = sadd.s32 %s68, 1
      %s70 = scalar_select %p67, %s68, %s69
      %p73 = pneg %p67
      %p74 = scmp.eq.s32.totalorder %s11, 2
      %p75 = por %p73, %p74
      %p76 = scmp.ne.s32.totalorder %s68, %s71
      %p77 = scmp.eq.s32.totalorder %s11, 0
      %p78 = por %p76, %p77
      %p79 = scmp.ne.s32.totalorder %s68, %s71
      %p80 = scmp.eq.s32.totalorder %s16, 2
      %p81 = por %p79, %p80
      %p82 = scmp.ne.s32.totalorder %s71, %s72
      %p83 = scmp.eq.s32.totalorder %s16, 0
      %p84 = por %p82, %p83
      %p85 = scmp.ne.s32.totalorder %s71, %s72
      %p86 = scmp.eq.s32.totalorder %s17, 2
      %p87 = por %p85, %p86
      %p89 = scmp.ne.s32.totalorder %s72, %s88
      %p90 = scmp.eq.s32.totalorder %s17, 0
      %p91 = por %p89, %p90
      %p92 = scmp.le.s32.totalorder 1, %s11
      %p93 = scmp.lt.s32.totalorder %s11, 4
      %p94 = pnand %p92, %p93
      %p95 = pneg %p94
      // Predicated region
      $region9: #{sinusoidal_positional_embedding.1} parent=5 // pred_check
        _
      $region10: #{sinusoidal_positional_embedding.1} parent=5 // pred_check_branch
        %97 = sbr.rel (%p94) target = $region12
      $region11: #{sinusoidal_positional_embedding.1} parent=5 // pred_region
        %s98 = ssub.s32 %s11, 1
        // Predicated region
        $region13: #{sinusoidal_positional_embedding.1} parent=11 // pred_check
          %p99 = pneg %p58
        $region14: #{sinusoidal_positional_embedding.1} parent=11 // pred_check_branch
          %101 = sbr.rel (%p99) target = $region16
        $region15: #{sinusoidal_positional_embedding.1} parent=11 // pred_region
          _
        $region16: #{sinusoidal_positional_embedding.1} parent=11 // pred_fallthru
          _
      $region12: #{sinusoidal_positional_embedding.1} parent=5 // pred_fallthru
        _
      %p102 = scmp.lt.s32.totalorder %s11, 3
      // Predicated region
      $region17: #{sinusoidal_positional_embedding.1} parent=5 // pred_check
        %p103 = pneg %p102
      $region18: #{sinusoidal_positional_embedding.1} parent=5 // pred_check_branch
        %105 = sbr.rel (%p103) target = $region20
      $region19: #{sinusoidal_positional_embedding.1} parent=5 // pred_region
        // Predicated region
        $region21: #{sinusoidal_positional_embedding.1} parent=19 // pred_check
          %p106 = pneg %p31
        $region22: #{sinusoidal_positional_embedding.1} parent=19 // pred_check_branch
          %108 = sbr.rel (%p106) target = $region24
        $region23: #{sinusoidal_positional_embedding.1} parent=19 // pred_region
          %s109 = smul.u32 2, %s11
          %p110 = scmp.lt.s32.totalorder %s109, 5
          %s111 = scalar_select %p110, %s109, 5
          %s112 = smul.addr %s111, 8
          %s113 = scalar_lea.vmem %s0, %s112
          %s114 = smul.u32 2, %s11
        $region24: #{sinusoidal_positional_embedding.1} parent=19 // pred_fallthru
          _
      $region20: #{sinusoidal_positional_embedding.1} parent=5 // pred_fallthru
        _
      %p115 = scmp.le.s32.totalorder 1, %s11
      %p116 = scmp.lt.s32.totalorder %s11, 4
      %p117 = pnand %p115, %p116
      %p118 = pneg %p117
      // Predicated region
      $region25: #{sinusoidal_positional_embedding.1} parent=5 // pred_check
        _
      $region26: #{sinusoidal_positional_embedding.1} parent=5 // pred_check_branch
        %120 = sbr.rel (%p117) target = $region28
      $region27: #{sinusoidal_positional_embedding.1} parent=5 // pred_region
        %s121 = ssub.s32 %s11, 1
        %s122 = smul.u32 2, %s16
        %p123 = scmp.lt.s32.totalorder %s122, 5
        %s124 = scalar_select %p123, %s122, 5
        %s125 = smul.addr %s124, 8
        %s126 = scalar_lea.vmem %s0, %s125
        %p127 = pneg %p37
        %p128 = pneg %p34
        %p129 = pneg %p58
        %p130 = pneg %p55
        %p131 = pneg %p84
        %p132 = pneg %p81
        %s133 = sand.u32 %s71, 1
        %s134 = scalar_lea.sflag [#allocation3], %s133
        %s135 = sand.u32 %s71, 1
        %s136 = smul.addr %s135, 32
        %s137 = scalar_lea.vmem [#allocation2], %s136
        %s138 = smul.u32 2, %s16
        %p139 = scmp.lt.s32.totalorder %s138, 5
        %s140 = scalar_select %p139, %s138, 5
        %s141 = smul.addr %s140, 8
        %s142 = scalar_lea.vmem %s0, %s141
        %s143 = smul.u32 2, %s16
        %s144 = smul.u32 2, %s16
        %v145 = vld [vmem:[%s142] sm:$0xff]
        %v146 = vld [vmem:[%s142 + $0x8] sm:$0xff]
        %v147 = vld [vmem:[%s1] sm:$0x1]
        %149 = vset.pattern.permute.xlu0 0
        %150 = vperm.xlu0 %149, %v145
        %v151 = vpop.permute.xlu0 %150
        %154 = vset.pattern.permute.xlu0 0
        %155 = vperm.xlu0 %154, %v146
        %v156 = vpop.permute.xlu0 %155
        %v159 = vlaneseq
        %v160 = vshrl.u32 %v159, 7
        %v161 = vsub.s32 0, %v160
        %v162 = vrot.slane %v147, %v161
        %v164 = vmul.f32 %v151, %v162
        %v165 = vmul.f32 %v156, %v162
        %v166 = vand.u32 2147483647, %v164
        %vm167 = vcmp.le.f32.partialorder %v166, 0.7853982
        %vm168 = vcmp.lt.s32.totalorder %v164, 0
        %v169 = vand.u32 %v164, 2139095040
        %v170 = vshrl.u32 %v169, 23
        %v171 = vsub.s32 %v170, 127
        %v172 = vand.u32 2147483647, %v164
        %v173 = vand.u32 %v172, 8388607
        %v174 = vor.u32 %v173, 8388608
        %v175 = vsub.s32 0, %v174
        %v176 = vadd.s32 %v171, 1
        %vm177 = vcmp.gt.s32.totalorder %v176, 0
        %v178 = vsel %vm177, %v176, 0
        %v179 = vshrl.u32 %v178, 5
        %v180 = vand.u32 %v178, 31
        %v181 = vsub.s32 32, %v180
        %v182 = vshrl.u32 683565275, %v181
        %v183 = vshll.u32 683565275, %v180
        %v184 = vshrl.u32 2475754826, %v181
        %v185 = vor.u32 %v183, %v184
        %v186 = vshll.u32 2475754826, %v180
        %v187 = vshrl.u32 2131351028, %v181
        %v188 = vor.u32 %v186, %v187
        %v189 = vshll.u32 2131351028, %v180
        %v190 = vshrl.u32 2102212464, %v181
        %v191 = vor.u32 %v189, %v190
        %v192 = vshll.u32 2102212464, %v180
        %v193 = vshrl.u32 920167782, %v181
        %v194 = vor.u32 %v192, %v193
        %v195 = vshll.u32 920167782, %v180
        %v196 = vshrl.u32 1326507024, %v181
        %v197 = vor.u32 %v195, %v196
        %vm198 = vcmp.lt.s32.totalorder %v179, 1
        %vm199 = vcmp.lt.s32.totalorder %v179, 2
        %vm200 = vcmp.lt.s32.totalorder %v179, 3
        %vm201 = vcmp.lt.s32.totalorder %v179, 4
        %v202 = vsel %vm198, %v182, %v185
        %v203 = vsel %vm201, %v191, 2102212464
        %v204 = vsel %vm200, %v188, %v203
        %v205 = vsel %vm199, %v202, %v204
        %v206 = vsel %vm198, %v185, %v188
        %v207 = vsel %vm201, %v194, 920167782
        %v208 = vsel %vm200, %v191, %v207
        %v209 = vsel %vm199, %v206, %v208
        %v210 = vsel %vm198, %v188, %v191
        %v211 = vsel %vm201, %v197, 1326507024
        %v212 = vsel %vm200, %v194, %v211
        %v213 = vsel %vm199, %v210, %v212
        %v214 = vshll.u32 %v174, 8
        %v215 = vmul.u32.u64.compose %v214, %v213
        %v216 = vextract.low.u32 %v215
        %v217 = vextract.high.u32 %v215
        %v218 = vmul.u32.u64.compose %v214, %v209
        %v219 = vextract.low.u32 %v218
        %v220 = vextract.high.u32 %v218
        %v221 = vmul.u32 %v214, %v205
        %v222 = vadd.s32 %v217, %v219
        %vm223 = vc.u32 %v217, %v219
        %v224 = vadd.s32 %v220, 1
        %v225 = vsel %vm223, %v224, %v220
        %v226 = vadd.s32 %v221, %v225
        %v227 = vadd.s32 %v226, 536870912
        %v228 = vshrl.u32 %v227, 30
        %v229 = vshll.u32 %v228, 30
        %v230 = vsub.s32 %v226, %v229
        %vm231 = vcmp.lt.s32.totalorder %v230, 0
        %v232 = vsub.s32 0, %v230
        %v233 = vsel %vm231, %v232, %v230
        %v234 = vclz %v233
        %v235 = vsub.s32 %v234, 2
        %vm236 = vcmp.gt.s32.totalorder 0, %v235
        %v237 = vsel %vm236, 0, %v235
        %v238 = vsub.s32 32, %v237
        %v239 = vshll.u32 %v230, %v237
        %v240 = vshrl.u32 %v222, %v238
        %v241 = vor.u32 %v239, %v240
        %v242 = vsub.s32 4294967266, %v237
        %v243 = vadd.s32 %v242, 127
        %v244 = vshll.u32 %v243, 23
        %v245 = vor.u32 4788187, %v244
        %v246 = vand.u32 2147483647, %v245
        %v248 = vcvt.s32.f32 %v241
        %v249 = vmul.f32 %v248, %v246
        %v250 = vxor.u32 %v249, 2147483648
        %v251 = vsel %vm168, %v250, %v249
        %v252 = vsub.s32 4, %v228
        %v253 = vsel %vm168, %v252, %v228
        %v254 = vsel %vm167, %v164, %v251
        %v255 = vsel %vm167, 0, %v253
        %v256 = vcosq.f32.pop %v254
        %v257 = vsinq.f32.pop %v254
        %vm258 = vweird.f32 %v164
        %v259 = vadd.s32 %v255, 3
        %v260 = vand.u32 %v259, 3
        %vm261 = vcmp.lt.s32.totalorder %v260, 2
        %vm262 = vcmp.eq.s32.totalorder %v260, 0
        %v263 = vxor.u32 %v257, 2147483648
        %v264 = vsel %vm262, %v256, %v263
        %vm265 = vcmp.eq.s32.totalorder %v260, 2
        %v266 = vxor.u32 %v256, 2147483648
        %v267 = vsel %vm265, %v266, %v257
        %v268 = vsel %vm261, %v264, %v267
        %v269 = vsel %vm258, nan, %v268
        %v270 = vand.u32 2147483647, %v165
        %vm271 = vcmp.le.f32.partialorder %v270, 0.7853982
        %vm272 = vcmp.lt.s32.totalorder %v165, 0
        %v273 = vand.u32 %v165, 2139095040
        %v274 = vshrl.u32 %v273, 23
        %v275 = vsub.s32 %v274, 127
        %v276 = vand.u32 2147483647, %v165
        %v277 = vand.u32 %v276, 8388607
        %v278 = vor.u32 %v277, 8388608
        %v279 = vsub.s32 0, %v278
        %v280 = vadd.s32 %v275, 1
        %vm281 = vcmp.gt.s32.totalorder %v280, 0
        %v282 = vsel %vm281, %v280, 0
        %v283 = vshrl.u32 %v282, 5
        %v284 = vand.u32 %v282, 31
        %v285 = vsub.s32 32, %v284
        %v286 = vshrl.u32 683565275, %v285
        %v287 = vshll.u32 683565275, %v284
        %v288 = vshrl.u32 2475754826, %v285
        %v289 = vor.u32 %v287, %v288
        %v290 = vshll.u32 2475754826, %v284
        %v291 = vshrl.u32 2131351028, %v285
        %v292 = vor.u32 %v290, %v291
        %v293 = vshll.u32 2131351028, %v284
        %v294 = vshrl.u32 2102212464, %v285
        %v295 = vor.u32 %v293, %v294
        %v296 = vshll.u32 2102212464, %v284
        %v297 = vshrl.u32 920167782, %v285
        %v298 = vor.u32 %v296, %v297
        %v299 = vshll.u32 920167782, %v284
        %v300 = vshrl.u32 1326507024, %v285
        %v301 = vor.u32 %v299, %v300
        %vm302 = vcmp.lt.s32.totalorder %v283, 1
        %vm303 = vcmp.lt.s32.totalorder %v283, 2
        %vm304 = vcmp.lt.s32.totalorder %v283, 3
        %vm305 = vcmp.lt.s32.totalorder %v283, 4
        %v306 = vsel %vm302, %v286, %v289
        %v307 = vsel %vm305, %v295, 2102212464
        %v308 = vsel %vm304, %v292, %v307
        %v309 = vsel %vm303, %v306, %v308
        %v310 = vsel %vm302, %v289, %v292
        %v311 = vsel %vm305, %v298, 920167782
        %v312 = vsel %vm304, %v295, %v311
        %v313 = vsel %vm303, %v310, %v312
        %v314 = vsel %vm302, %v292, %v295
        %v315 = vsel %vm305, %v301, 1326507024
        %v316 = vsel %vm304, %v298, %v315
        %v317 = vsel %vm303, %v314, %v316
        %v318 = vshll.u32 %v278, 8
        %v319 = vmul.u32.u64.compose %v318, %v317
        %v320 = vextract.low.u32 %v319
        %v321 = vextract.high.u32 %v319
        %v322 = vmul.u32.u64.compose %v318, %v313
        %v323 = vextract.low.u32 %v322
        %v324 = vextract.high.u32 %v322
        %v325 = vmul.u32 %v318, %v309
        %v326 = vadd.s32 %v321, %v323
        %vm327 = vc.u32 %v321, %v323
        %v328 = vadd.s32 %v324, 1
        %v329 = vsel %vm327, %v328, %v324
        %v330 = vadd.s32 %v325, %v329
        %v331 = vadd.s32 %v330, 536870912
        %v332 = vshrl.u32 %v331, 30
        %v333 = vshll.u32 %v332, 30
        %v334 = vsub.s32 %v330, %v333
        %vm335 = vcmp.lt.s32.totalorder %v334, 0
        %v336 = vsub.s32 0, %v334
        %v337 = vsel %vm335, %v336, %v334
        %v338 = vclz %v337
        %v339 = vsub.s32 %v338, 2
        %vm340 = vcmp.gt.s32.totalorder 0, %v339
        %v341 = vsel %vm340, 0, %v339
        %v342 = vsub.s32 32, %v341
        %v343 = vshll.u32 %v334, %v341
        %v344 = vshrl.u32 %v326, %v342
        %v345 = vor.u32 %v343, %v344
        %v346 = vsub.s32 4294967266, %v341
        %v347 = vadd.s32 %v346, 127
        %v348 = vshll.u32 %v347, 23
        %v349 = vor.u32 4788187, %v348
        %v350 = vand.u32 2147483647, %v349
        %v352 = vcvt.s32.f32 %v345
        %v353 = vmul.f32 %v352, %v350
        %v354 = vxor.u32 %v353, 2147483648
        %v355 = vsel %vm272, %v354, %v353
        %v356 = vsub.s32 4, %v332
        %v357 = vsel %vm272, %v356, %v332
        %v358 = vsel %vm271, %v165, %v355
        %v359 = vsel %vm271, 0, %v357
        %v360 = vcosq.f32.pop %v358
        %v361 = vsinq.f32.pop %v358
        %vm362 = vweird.f32 %v165
        %v363 = vadd.s32 %v359, 3
        %v364 = vand.u32 %v363, 3
        %vm365 = vcmp.lt.s32.totalorder %v364, 2
        %vm366 = vcmp.eq.s32.totalorder %v364, 0
        %v367 = vxor.u32 %v361, 2147483648
        %v368 = vsel %vm366, %v360, %v367
        %vm369 = vcmp.eq.s32.totalorder %v364, 2
        %v370 = vxor.u32 %v360, 2147483648
        %v371 = vsel %vm369, %v370, %v361
        %v372 = vsel %vm365, %v368, %v371
        %v373 = vsel %vm362, nan, %v372
        %374 = vst [vmem:[%s137] sm:$0xff] %v269
        %375 = vst [vmem:[%s137 + $0x10] sm:$0xff] %v373
        %v376 = vand.u32 2147483647, %v164
        %vm377 = vcmp.le.f32.partialorder %v376, 0.7853982
        %vm378 = vcmp.lt.s32.totalorder %v164, 0
        %v379 = vand.u32 %v164, 2139095040
        %v380 = vshrl.u32 %v379, 23
        %v381 = vsub.s32 %v380, 127
        %v382 = vand.u32 2147483647, %v164
        %v383 = vand.u32 %v382, 8388607
        %v384 = vor.u32 %v383, 8388608
        %v385 = vsub.s32 0, %v384
        %v386 = vadd.s32 %v381, 1
        %vm387 = vcmp.gt.s32.totalorder %v386, 0
        %v388 = vsel %vm387, %v386, 0
        %v389 = vshrl.u32 %v388, 5
        %v390 = vand.u32 %v388, 31
        %v391 = vsub.s32 32, %v390
        %v392 = vshrl.u32 683565275, %v391
        %v393 = vshll.u32 683565275, %v390
        %v394 = vshrl.u32 2475754826, %v391
        %v395 = vor.u32 %v393, %v394
        %v396 = vshll.u32 2475754826, %v390
        %v397 = vshrl.u32 2131351028, %v391
        %v398 = vor.u32 %v396, %v397
        %v399 = vshll.u32 2131351028, %v390
        %v400 = vshrl.u32 2102212464, %v391
        %v401 = vor.u32 %v399, %v400
        %v402 = vshll.u32 2102212464, %v390
        %v403 = vshrl.u32 920167782, %v391
        %v404 = vor.u32 %v402, %v403
        %v405 = vshll.u32 920167782, %v390
        %v406 = vshrl.u32 1326507024, %v391
        %v407 = vor.u32 %v405, %v406
        %vm408 = vcmp.lt.s32.totalorder %v389, 1
        %vm409 = vcmp.lt.s32.totalorder %v389, 2
        %vm410 = vcmp.lt.s32.totalorder %v389, 3
        %vm411 = vcmp.lt.s32.totalorder %v389, 4
        %v412 = vsel %vm408, %v392, %v395
        %v413 = vsel %vm411, %v401, 2102212464
        %v414 = vsel %vm410, %v398, %v413
        %v415 = vsel %vm409, %v412, %v414
        %v416 = vsel %vm408, %v395, %v398
        %v417 = vsel %vm411, %v404, 920167782
        %v418 = vsel %vm410, %v401, %v417
        %v419 = vsel %vm409, %v416, %v418
        %v420 = vsel %vm408, %v398, %v401
        %v421 = vsel %vm411, %v407, 1326507024
        %v422 = vsel %vm410, %v404, %v421
        %v423 = vsel %vm409, %v420, %v422
        %v424 = vshll.u32 %v384, 8
        %v425 = vmul.u32.u64.compose %v424, %v423
        %v426 = vextract.low.u32 %v425
        %v427 = vextract.high.u32 %v425
        %v428 = vmul.u32.u64.compose %v424, %v419
        %v429 = vextract.low.u32 %v428
        %v430 = vextract.high.u32 %v428
        %v431 = vmul.u32 %v424, %v415
        %v432 = vadd.s32 %v427, %v429
        %vm433 = vc.u32 %v427, %v429
        %v434 = vadd.s32 %v430, 1
        %v435 = vsel %vm433, %v434, %v430
        %v436 = vadd.s32 %v431, %v435
        %v437 = vadd.s32 %v436, 536870912
        %v438 = vshrl.u32 %v437, 30
        %v439 = vshll.u32 %v438, 30
        %v440 = vsub.s32 %v436, %v439
        %vm441 = vcmp.lt.s32.totalorder %v440, 0
        %v442 = vsub.s32 0, %v440
        %v443 = vsel %vm441, %v442, %v440
        %v444 = vclz %v443
        %v445 = vsub.s32 %v444, 2
        %vm446 = vcmp.gt.s32.totalorder 0, %v445
        %v447 = vsel %vm446, 0, %v445
        %v448 = vsub.s32 32, %v447
        %v449 = vshll.u32 %v440, %v447
        %v450 = vshrl.u32 %v432, %v448
        %v451 = vor.u32 %v449, %v450
        %v452 = vsub.s32 4294967266, %v447
        %v453 = vadd.s32 %v452, 127
        %v454 = vshll.u32 %v453, 23
        %v455 = vor.u32 4788187, %v454
        %v456 = vand.u32 2147483647, %v455
        %v458 = vcvt.s32.f32 %v451
        %v459 = vmul.f32 %v458, %v456
        %v460 = vxor.u32 %v459, 2147483648
        %v461 = vsel %vm378, %v460, %v459
        %v462 = vsub.s32 4, %v438
        %v463 = vsel %vm378, %v462, %v438
        %v464 = vsel %vm377, %v164, %v461
        %v465 = vsel %vm377, 0, %v463
        %v466 = vcosq.f32.pop %v464
        %v467 = vsinq.f32.pop %v464
        %vm468 = vweird.f32 %v164
        %v469 = vand.u32 %v465, 3
        %vm470 = vcmp.lt.s32.totalorder %v469, 2
        %vm471 = vcmp.eq.s32.totalorder %v469, 0
        %v472 = vxor.u32 %v467, 2147483648
        %v473 = vsel %vm471, %v466, %v472
        %vm474 = vcmp.eq.s32.totalorder %v469, 2
        %v475 = vxor.u32 %v466, 2147483648
        %v476 = vsel %vm474, %v475, %v467
        %v477 = vsel %vm470, %v473, %v476
        %v478 = vsel %vm468, nan, %v477
        %v479 = vand.u32 2147483647, %v165
        %vm480 = vcmp.le.f32.partialorder %v479, 0.7853982
        %vm481 = vcmp.lt.s32.totalorder %v165, 0
        %v482 = vand.u32 %v165, 2139095040
        %v483 = vshrl.u32 %v482, 23
        %v484 = vsub.s32 %v483, 127
        %v485 = vand.u32 2147483647, %v165
        %v486 = vand.u32 %v485, 8388607
        %v487 = vor.u32 %v486, 8388608
        %v488 = vsub.s32 0, %v487
        %v489 = vadd.s32 %v484, 1
        %vm490 = vcmp.gt.s32.totalorder %v489, 0
        %v491 = vsel %vm490, %v489, 0
        %v492 = vshrl.u32 %v491, 5
        %v493 = vand.u32 %v491, 31
        %v494 = vsub.s32 32, %v493
        %v495 = vshrl.u32 683565275, %v494
        %v496 = vshll.u32 683565275, %v493
        %v497 = vshrl.u32 2475754826, %v494
        %v498 = vor.u32 %v496, %v497
        %v499 = vshll.u32 2475754826, %v493
        %v500 = vshrl.u32 2131351028, %v494
        %v501 = vor.u32 %v499, %v500
        %v502 = vshll.u32 2131351028, %v493
        %v503 = vshrl.u32 2102212464, %v494
        %v504 = vor.u32 %v502, %v503
        %v505 = vshll.u32 2102212464, %v493
        %v506 = vshrl.u32 920167782, %v494
        %v507 = vor.u32 %v505, %v506
        %v508 = vshll.u32 920167782, %v493
        %v509 = vshrl.u32 1326507024, %v494
        %v510 = vor.u32 %v508, %v509
        %vm511 = vcmp.lt.s32.totalorder %v492, 1
        %vm512 = vcmp.lt.s32.totalorder %v492, 2
        %vm513 = vcmp.lt.s32.totalorder %v492, 3
        %vm514 = vcmp.lt.s32.totalorder %v492, 4
        %v515 = vsel %vm511, %v495, %v498
        %v516 = vsel %vm514, %v504, 2102212464
        %v517 = vsel %vm513, %v501, %v516
        %v518 = vsel %vm512, %v515, %v517
        %v519 = vsel %vm511, %v498, %v501
        %v520 = vsel %vm514, %v507, 920167782
        %v521 = vsel %vm513, %v504, %v520
        %v522 = vsel %vm512, %v519, %v521
        %v523 = vsel %vm511, %v501, %v504
        %v524 = vsel %vm514, %v510, 1326507024
        %v525 = vsel %vm513, %v507, %v524
        %v526 = vsel %vm512, %v523, %v525
        %v527 = vshll.u32 %v487, 8
        %v528 = vmul.u32.u64.compose %v527, %v526
        %v529 = vextract.low.u32 %v528
        %v530 = vextract.high.u32 %v528
        %v531 = vmul.u32.u64.compose %v527, %v522
        %v532 = vextract.low.u32 %v531
        %v533 = vextract.high.u32 %v531
        %v534 = vmul.u32 %v527, %v518
        %v535 = vadd.s32 %v530, %v532
        %vm536 = vc.u32 %v530, %v532
        %v537 = vadd.s32 %v533, 1
        %v538 = vsel %vm536, %v537, %v533
        %v539 = vadd.s32 %v534, %v538
        %v540 = vadd.s32 %v539, 536870912
        %v541 = vshrl.u32 %v540, 30
        %v542 = vshll.u32 %v541, 30
        %v543 = vsub.s32 %v539, %v542
        %vm544 = vcmp.lt.s32.totalorder %v543, 0
        %v545 = vsub.s32 0, %v543
        %v546 = vsel %vm544, %v545, %v543
        %v547 = vclz %v546
        %v548 = vsub.s32 %v547, 2
        %vm549 = vcmp.gt.s32.totalorder 0, %v548
        %v550 = vsel %vm549, 0, %v548
        %v551 = vsub.s32 32, %v550
        %v552 = vshll.u32 %v543, %v550
        %v553 = vshrl.u32 %v535, %v551
        %v554 = vor.u32 %v552, %v553
        %v555 = vsub.s32 4294967266, %v550
        %v556 = vadd.s32 %v555, 127
        %v557 = vshll.u32 %v556, 23
        %v558 = vor.u32 4788187, %v557
        %v559 = vand.u32 2147483647, %v558
        %v561 = vcvt.s32.f32 %v554
        %v562 = vmul.f32 %v561, %v559
        %v563 = vxor.u32 %v562, 2147483648
        %v564 = vsel %vm481, %v563, %v562
        %v565 = vsub.s32 4, %v541
        %v566 = vsel %vm481, %v565, %v541
        %v567 = vsel %vm480, %v165, %v564
        %v568 = vsel %vm480, 0, %v566
        %v569 = vcosq.f32.pop %v567
        %v570 = vsinq.f32.pop %v567
        %vm571 = vweird.f32 %v165
        %v572 = vand.u32 %v568, 3
        %vm573 = vcmp.lt.s32.totalorder %v572, 2
        %vm574 = vcmp.eq.s32.totalorder %v572, 0
        %v575 = vxor.u32 %v570, 2147483648
        %v576 = vsel %vm574, %v569, %v575
        %vm577 = vcmp.eq.s32.totalorder %v572, 2
        %v578 = vxor.u32 %v569, 2147483648
        %v579 = vsel %vm577, %v578, %v570
        %v580 = vsel %vm573, %v576, %v579
        %v581 = vsel %vm571, nan, %v580
        %582 = vst [vmem:[%s137 + $0x8] sm:$0xff] %v478
        %583 = vst [vmem:[%s137 + $0x18] sm:$0xff] %v581
        %s584 = sand.u32 %s71, 1
        %s585 = scalar_lea.sflag [#allocation3], %s584
        %s586 = sand.u32 %s71, 1
        %s587 = smul.addr %s586, 32
        %s588 = scalar_lea.vmem [#allocation2], %s587
        // Predicated region
        $region29: #{sinusoidal_positional_embedding.1} parent=27 // pred_check
          %p589 = pneg %p81
        $region30: #{sinusoidal_positional_embedding.1} parent=27 // pred_check_branch
          %591 = sbr.rel (%p589) target = $region32
        $region31: #{sinusoidal_positional_embedding.1} parent=27 // pred_region
          %s592 = smul.u32 2, %s16
          %s594 = ssub.s32 512, 512
          %595 = vsyncadd %s585, %s594
          %s596 = smul.addr %s592, 2
          %s597 = smul.addr %s596, 128
          %s598 = scalar_lea.hbm %s2, %s597
          %s599 = sshll.u32 %s588, 4
          %s600 = int_to_ptr.vmem [resolvable:$true] %s599
          %605 = dma.vmem_to_hbm [thread:$0]  %s600, 512, %s598, %s585, 256, 256, 16
        $region32: #{sinusoidal_positional_embedding.1} parent=27 // pred_fallthru
          _
      $region28: #{sinusoidal_positional_embedding.1} parent=5 // pred_fallthru
        _
      %p606 = scmp.le.s32.totalorder 2, %s11
      // Predicated region
      $region33: #{sinusoidal_positional_embedding.1} parent=5 // pred_check
        %p607 = pneg %p606
      $region34: #{sinusoidal_positional_embedding.1} parent=5 // pred_check_branch
        %609 = sbr.rel (%p607) target = $region36
      $region35: #{sinusoidal_positional_embedding.1} parent=5 // pred_region
        %s610 = ssub.s32 %s11, 2
        // Predicated region
        $region37: #{sinusoidal_positional_embedding.1} parent=35 // pred_check
          %p611 = pneg %p87
        $region38: #{sinusoidal_positional_embedding.1} parent=35 // pred_check_branch
          %613 = sbr.rel (%p611) target = $region40
        $region39: #{sinusoidal_positional_embedding.1} parent=35 // pred_region
          %s614 = sand.u32 %s72, 1
          %s615 = scalar_lea.sflag [#allocation3], %s614
          %s616 = sand.u32 %s72, 1
          %s617 = smul.addr %s616, 32
          %s618 = scalar_lea.vmem [#allocation2], %s617
          %619 = dma.done %s615, 512
        $region40: #{sinusoidal_positional_embedding.1} parent=35 // pred_fallthru
          _
      $region36: #{sinusoidal_positional_embedding.1} parent=5 // pred_fallthru
        _
    $region6: #{sinusoidal_positional_embedding.1} parent=1 // loop_footer
      %s15 = sadd.s32 1, %s11
    $region7: #{sinusoidal_positional_embedding.1} parent=1 // loop_footer_branch
      %10 = sbr.rel target = $region3
    $region8: #{sinusoidal_positional_embedding.1} parent=1 // loop_exit
      _
    %620 = vsyncpa [#allocation3], 1
    %s621 = scalar_lea.sflag [#allocation3], 1
    %622 = vsyncpa %s621, 1

</llo_original>
